<compile_context>
chip_gen: v7x
topology: tpu7x:2x2x1
jax: 0.10.0
libtpu: 0.0.40
codegen_flags: <defaults>
</compile_context>

<pallas_src>
import functools

import numpy as np
import jax
import jax.numpy as jnp
from jax.experimental import pallas as pl
from jax.experimental.pallas import tpu as pltpu


# ---------------------------------------------------------------------------
# __init__ equivalent: build v0s/v1s/v2s/v3s from faces (numpy, mirrors torch)
# ---------------------------------------------------------------------------
def build_flatten_indices(faces):
    faces = np.asarray(faces, np.int32)
    verts = list(set(
        tuple(v) for v in np.sort(
            np.concatenate((faces[:, 0:2], faces[:, 1:3]), axis=0))
    ))
    v0s = np.array([v[0] for v in verts], "int32")
    v1s = np.array([v[1] for v in verts], "int32")
    v2s, v3s = [], []
    for v0, v1 in zip(v0s, v1s):
        bface = np.sum(faces == v0, axis=1) + np.sum(faces == v1, axis=1)
        fidxs = np.where(bface == 2)[0]
        f1 = faces[fidxs[0]]
        v2s.append(f1[(f1 != v1) * (f1 != v0)][0])
        f2 = faces[fidxs[1]]
        v3s.append(f2[(f2 != v1) * (f2 != v0)][0])
    return v0s, v1s, np.array(v2s, "int32"), np.array(v3s, "int32")


# ---------------------------------------------------------------------------
# Pallas kernel factory (all closure constants are Python ints / floats)
# ---------------------------------------------------------------------------
def _make_kernel(E, K, TILE_E, TR, eps):
    E = int(E)
    K = int(K)
    TILE_E = int(TILE_E)
    TR = int(TR)
    eps = float(eps)
    NCHUNK = TR // 8
    # partial-unroll factor that divides the chunk count exactly
    UNROLL = next(u for u in (8, 4, 2, 1) if NCHUNK % u == 0)

    def kernel(e_ref, out_ref, acc_ref):
        s = pl.program_id(0)          # parallel split
        k = pl.program_id(1)          # reduction step within split

        @pl.when(k == 0)
        def _init():
            acc_ref[...] = jnp.zeros_like(acc_ref)

        block_base = (s * K + k) * TILE_E      # element offset of this block

        def chunk_contrib(i):
            """(1 - cos) for one (8,128) chunk of edges. Pure per-lane VPU/EUP."""
            row0 = pl.multiple_of(i * 8, 8)
            a1x = e_ref[0, pl.ds(row0, 8), :]
            a1y = e_ref[1, pl.ds(row0, 8), :]
            a1z = e_ref[2, pl.ds(row0, 8), :]
            b1x = e_ref[3, pl.ds(row0, 8), :]
            b1y = e_ref[4, pl.ds(row0, 8), :]
            b1z = e_ref[5, pl.ds(row0, 8), :]
            b2x = e_ref[6, pl.ds(row0, 8), :]
            b2y = e_ref[7, pl.ds(row0, 8), :]
            b2z = e_ref[8, pl.ds(row0, 8), :]

            # per-lane 3-term dot products (no cross-sublane reductions)
            a1l2 = a1x * a1x + a1y * a1y + a1z * a1z
            b1l2 = b1x * b1x + b1y * b1y + b1z * b1z
            b2l2 = b2x * b2x + b2y * b2y + b2z * b2z
            ab1 = a1x * b1x + a1y * b1y + a1z * b1z
            ab2 = a1x * b2x + a1y * b2y + a1z * b2z
            b12 = b1x * b2x + b1y * b2y + b1z * b2z

            a1l1 = jnp.sqrt(a1l2 + eps)
            b1l1 = jnp.sqrt(b1l2 + eps)
            b2l1 = jnp.sqrt(b2l2 + eps)

            # eps placement identical to the torch forward
            cos1 = ab1 / (a1l1 * b1l1 + eps)
            cos2 = ab2 / (a1l1 * b2l1 + eps)
            sin1 = jnp.sqrt(1.0 - cos1 * cos1 + eps)
            sin2 = jnp.sqrt(1.0 - cos2 * cos2 + eps)

            inv_a = 1.0 / (a1l2 + eps)          # shared reciprocal (item 5)
            t1 = ab1 * inv_a
            t2 = ab2 * inv_a
            # cb1.cb2 with cb1 = b1 - t1*a1, cb2 = b2 - t2*a1, expanded
            # (exact algebra; avoids materializing the 6 cb* components)
            num = b12 - t1 * ab2 - t2 * ab1 + t1 * t2 * a1l2
            den = (b1l1 * sin1) * (b2l1 * sin2) + eps
            return 1.0 - num / den

        no_padding = block_base + TILE_E <= E   # block holds only valid edges

        @pl.when(no_padding)
        def _fast():
            def body(i, carry):
                acc_ref[...] += chunk_contrib(i)
                return carry
            jax.lax.fori_loop(0, NCHUNK, body, 0, unroll=UNROLL)

        @pl.when(jnp.logical_not(no_padding))
        def _masked():
            # global element index of each lane; iota hoisted out of the loop
            r = jax.lax.broadcasted_iota(jnp.int32, (8, 128), 0)
            c = jax.lax.broadcasted_iota(jnp.int32, (8, 128), 1)
            offs = block_base + r * 128 + c

            def body(i, carry):
                contrib = chunk_contrib(i)
                gidx = offs + i * 1024
                acc_ref[...] += jnp.where(gidx < E, contrib, 0.0)
                return carry
            jax.lax.fori_loop(0, NCHUNK, body, 0, unroll=UNROLL)

        @pl.when(k == pl.num_programs(1) - 1)
        def _finalize():
            out_ref[0, 0] = jnp.sum(acc_ref[...])   # one full reduce per split

    return kernel


# ---------------------------------------------------------------------------
# Wrapper: gather/pack in XLA, tiled reduction in Pallas
# ---------------------------------------------------------------------------
def flatten_loss_original(vertices, v0s, v1s, v2s, v3s, eps=1e-6,
                          max_tile_units=64):
    vertices = jnp.asarray(vertices, jnp.float32)
    v0s = jnp.asarray(v0s, jnp.int32)
    v1s = jnp.asarray(v1s, jnp.int32)
    v2s = jnp.asarray(v2s, jnp.int32)
    v3s = jnp.asarray(v3s, jnp.int32)
    E = int(v0s.shape[0])

    UNIT = 1024                       # 8 sublanes x 128 lanes per row-group
    cdiv = lambda a, b: -(-a // b)
    total_units = cdiv(E, UNIT)
    NSPLIT = 2 if total_units >= 2 else 1       # 2 TCs on v7x; 1 for tiny E
    units_per_split = cdiv(total_units, NSPLIT)
    K = cdiv(units_per_split, max_tile_units)   # reduction steps per split
    tile_units = cdiv(units_per_split, K)
    TILE_E = tile_units * UNIT
    TR = tile_units * 8                         # rows (of 128 lanes) per step
    Ep = NSPLIT * K * TILE_E
    R = Ep // 128

    # Gather from vertices.T so streams come out as (3, E): no big transpose.
    vt = vertices.T                             # (3, V)
    v0 = vt[:, v0s]                             # (3, E)

    def stream(idx):
        d = vt[:, idx] - v0                     # (3, E)
        return jnp.pad(d, ((0, 0), (0, Ep - E)))    # (3, Ep), zero padded

    # Pack a1/b1/b2 into a single lane-dense array -> one DMA per grid step.
    packed = jnp.concatenate(
        [stream(v1s), stream(v2s), stream(v3s)], axis=0)     # (9, Ep)
    packed = packed.reshape(9, R, 128)

    kernel = _make_kernel(E=E, K=K, TILE_E=TILE_E, TR=TR, eps=eps)

    e_spec = pl.BlockSpec((9, TR, 128), lambda s, k: (0, s * K + k, 0))

    partials = pl.pallas_call(
        kernel,
        out_shape=jax.ShapeDtypeStruct((NSPLIT, 1), jnp.float32),
        grid_spec=pltpu.PrefetchScalarGridSpec(
            num_scalar_prefetch=0,
            grid=(NSPLIT, K),
            in_specs=[e_spec],
            out_specs=pl.BlockSpec((1, 1), lambda s, k: (s, 0),
                                   memory_space=pltpu.MemorySpace.SMEM),
            scratch_shapes=[pltpu.VMEM((8, 128), jnp.float32)],
        ),
        compiler_params=pltpu.CompilerParams(
            dimension_semantics=("parallel", "arbitrary")),
    )(packed)

    return jnp.sum(partials) * (1.0 / E)


# ---------------------------------------------------------------------------
# Pure-JAX reference (mirrors the torch forward) for a correctness check
# ---------------------------------------------------------------------------
def flatten_loss_original_ref(vertices, v0s, v1s, v2s, v3s, eps=1e-6):
    vertices = jnp.asarray(vertices, jnp.float32)
    v0 = vertices[v0s, :]
    v1 = vertices[v1s, :]
    v2 = vertices[v2s, :]
    v3 = vertices[v3s, :]
    a1 = v1 - v0
    b1 = v2 - v0
    a1l2 = (a1 ** 2).sum(-1)
    b1l2 = (b1 ** 2).sum(-1)
    a1l1 = jnp.sqrt(a1l2 + eps)
    b1l1 = jnp.sqrt(b1l2 + eps)
    ab1 = (a1 * b1).sum(-1)
    cos1 = ab1 / (a1l1 * b1l1 + eps)
    sin1 = jnp.sqrt(1 - cos1 ** 2 + eps)
    c1 = a1 * (ab1 / (a1l2 + eps))[:, None]
    cb1 = b1 - c1
    cb1l1 = b1l1 * sin1
    a2 = v1 - v0
    b2 = v3 - v0
    a2l2 = (a2 ** 2).sum(-1)
    b2l2 = (b2 ** 2).sum(-1)
    a2l1 = jnp.sqrt(a2l2 + eps)
    b2l1 = jnp.sqrt(b2l2 + eps)
    ab2 = (a2 * b2).sum(-1)
    cos2 = ab2 / (a2l1 * b2l1 + eps)
    sin2 = jnp.sqrt(1 - cos2 ** 2 + eps)
    c2 = a2 * (ab2 / (a2l2 + eps))[:, None]
    cb2 = b2 - c2
    cb2l1 = b2l1 * sin2
    cos = (cb1 * cb2).sum(-1) / (cb1l1 * cb2l1 + eps)
    return (1 - cos).mean()


# ---------------------------------------------------------------------------
# Test meshes (closed manifolds so every edge has exactly 2 incident faces)
# ---------------------------------------------------------------------------
def octahedron_faces():
    return np.array(
        [[0, 2, 4], [2, 1, 4], [1, 3, 4], [3, 0, 4],
         [2, 0, 5], [1, 2, 5], [3, 1, 5], [0, 3, 5]], dtype=np.int32)


def torus_faces(n, m):
    faces = []
    for i in range(n):
        for j in range(m):
            v00 = i * m + j
            v01 = i * m + (j + 1) % m
            v10 = ((i + 1) % n) * m + j
            v11 = ((i + 1) % n) * m + (j + 1) % m
            faces.append([v00, v01, v11])
            faces.append([v00, v11, v10])
    return np.array(faces, np.int32)


if __name__ == "__main__":
    key = jax.random.PRNGKey(0)
    k1, k2, k3 = jax.random.split(key, 3)

    def check(verts, idx, **kw):
        v0s, v1s, v2s, v3s = idx
        fn = jax.jit(functools.partial(flatten_loss_original, **kw))
        loss = jax.block_until_ready(fn(verts, v0s, v1s, v2s, v3s))
        ref = jax.block_until_ready(
            flatten_loss_original_ref(verts, v0s, v1s, v2s, v3s))
        assert np.allclose(np.asarray(loss), np.asarray(ref),
                           atol=1e-5, rtol=1e-4), (float(loss), float(ref))

    # Test 1: octahedron (6 vertices, 8 faces, 12 edges) -> single tiny tile.
    faces = octahedron_faces()
    idx = build_flatten_indices(faces)
    verts = jax.random.normal(k1, (6, 3), dtype=jnp.float32)
    check(verts, idx)

    # Test 2: 8x8 torus (64 vertices, 128 faces, 192 edges).
    faces = torus_faces(8, 8)
    idx = build_flatten_indices(faces)
    verts = jax.random.normal(k2, (64, 3), dtype=jnp.float32)
    check(verts, idx)

    # Test 3: 32x32 torus (1024 vertices, 2048 faces, 3072 edges):
    #   exercises NSPLIT=2, multi-chunk inner loop, fast + masked paths.
    faces = torus_faces(32, 32)
    idx = build_flatten_indices(faces)
    verts = jax.random.normal(k3, (1024, 3), dtype=jnp.float32)
    check(verts, idx)
    #   same mesh with forced 1-unit tiles -> K=2 reduction steps per split.
    check(verts, idx, max_tile_units=1)

    print("KERNEL_OK")
</pallas_src>

<mosaic_0001>
module attributes {stable_mosaic.version = 11 : i64} {
  func.func @kernel(%arg0: i32, %arg1: i32, %arg2: memref<9x8x128xf32, #tpu.memory_space<vmem>>, %arg3: memref<1x1xf32, #tpu.memory_space<smem>>, %arg4: memref<8x128xf32, #tpu.memory_space<vmem>>) attributes {dimension_semantics = [#tpu.dimension_semantics<parallel>, #tpu.dimension_semantics<arbitrary>], iteration_bounds = array<i64: 1, 1>, scalar_prefetch = 0 : i64, scratch_operands = 1 : i64, tpu.core_type = #tpu.core_type<tc>, window_params = [{transform_indices = @transform_0, window_bounds = array<i64: 9, 8, 128>}, {transform_indices = @transform_1, window_bounds = array<i64: 1, 1>}]} {
    %c0_i32 = arith.constant 0 : i32
    %0 = arith.cmpi eq, %arg1, %c0_i32 : i32
    %1 = arith.extui %0 : i1 to i32
    %c0_i32_0 = arith.constant 0 : i32
    %2 = arith.cmpi ne, %1, %c0_i32_0 : i32
    scf.if %2 {
      %cst = arith.constant 0.000000e+00 : f32
      %16 = vector.broadcast %cst : f32 to vector<8x128xf32>
      %c0 = arith.constant 0 : index
      %c0_6 = arith.constant 0 : index
      %17 = vector.load %arg4[%c0, %c0_6] : memref<8x128xf32, #tpu.memory_space<vmem>>, vector<8x128xf32>
      tpu.vector_store %arg4[%c0, %c0_6], %16 {strides = array<i32>} : memref<8x128xf32, #tpu.memory_space<vmem>>, vector<8x128xf32>,
    } else {
    }
    %c1_i32 = arith.constant 1 : i32
    %3 = arith.muli %arg0, %c1_i32 : i32
    %4 = arith.addi %3, %arg1 : i32
    %c1024_i32 = arith.constant 1024 : i32
    %5 = arith.muli %4, %c1024_i32 : i32
    %c1024_i32_1 = arith.constant 1024 : i32
    %6 = arith.addi %5, %c1024_i32_1 : i32
    %c12_i32 = arith.constant 12 : i32
    %7 = arith.cmpi sle, %6, %c12_i32 : i32
    %8 = arith.extui %7 : i1 to i32
    %c0_i32_2 = arith.constant 0 : i32
    %9 = arith.cmpi ne, %8, %c0_i32_2 : i32
    scf.if %9 {
      %c0_i32_6 = arith.constant 0 : i32
      %c0 = arith.constant 0 : index
      %c0_7 = arith.constant 0 : index
      %16 = vector.load %arg4[%c0, %c0_7] : memref<8x128xf32, #tpu.memory_space<vmem>>, vector<8x128xf32>
      %c8_i32 = arith.constant 8 : i32
      %17 = arith.muli %c0_i32_6, %c8_i32 : i32
      %18 = tpu.assume_multiple %17, 8 : i32
      %c0_8 = arith.constant 0 : index
      %19 = arith.index_cast %18 : i32 to index
      %c0_9 = arith.constant 0 : index
      %20 = vector.load %arg2[%c0_8, %19, %c0_9] : memref<9x8x128xf32, #tpu.memory_space<vmem>>, vector<1x8x128xf32>
      %21 = vector.shape_cast %20 : vector<1x8x128xf32> to vector<8x128xf32>
      %c1 = arith.constant 1 : index
      %22 = arith.index_cast %18 : i32 to index
      %c0_10 = arith.constant 0 : index
      %23 = vector.load %arg2[%c1, %22, %c0_10] : memref<9x8x128xf32, #tpu.memory_space<vmem>>, vector<1x8x128xf32>
      %24 = vector.shape_cast %23 : vector<1x8x128xf32> to vector<8x128xf32>
      %c2 = arith.constant 2 : index
      %25 = arith.index_cast %18 : i32 to index
      %c0_11 = arith.constant 0 : index
      %26 = vector.load %arg2[%c2, %25, %c0_11] : memref<9x8x128xf32, #tpu.memory_space<vmem>>, vector<1x8x128xf32>
      %27 = vector.shape_cast %26 : vector<1x8x128xf32> to vector<8x128xf32>
      %c3 = arith.constant 3 : index
      %28 = arith.index_cast %18 : i32 to index
      %c0_12 = arith.constant 0 : index
      %29 = vector.load %arg2[%c3, %28, %c0_12] : memref<9x8x128xf32, #tpu.memory_space<vmem>>, vector<1x8x128xf32>
      %30 = vector.shape_cast %29 : vector<1x8x128xf32> to vector<8x128xf32>
      %c4 = arith.constant 4 : index
      %31 = arith.index_cast %18 : i32 to index
      %c0_13 = arith.constant 0 : index
      %32 = vector.load %arg2[%c4, %31, %c0_13] : memref<9x8x128xf32, #tpu.memory_space<vmem>>, vector<1x8x128xf32>
      %33 = vector.shape_cast %32 : vector<1x8x128xf32> to vector<8x128xf32>
      %c5 = arith.constant 5 : index
      %34 = arith.index_cast %18 : i32 to index
      %c0_14 = arith.constant 0 : index
      %35 = vector.load %arg2[%c5, %34, %c0_14] : memref<9x8x128xf32, #tpu.memory_space<vmem>>, vector<1x8x128xf32>
      %36 = vector.shape_cast %35 : vector<1x8x128xf32> to vector<8x128xf32>
      %c6 = arith.constant 6 : index
      %37 = arith.index_cast %18 : i32 to index
      %c0_15 = arith.constant 0 : index
      %38 = vector.load %arg2[%c6, %37, %c0_15] : memref<9x8x128xf32, #tpu.memory_space<vmem>>, vector<1x8x128xf32>
      %39 = vector.shape_cast %38 : vector<1x8x128xf32> to vector<8x128xf32>
      %c7 = arith.constant 7 : index
      %40 = arith.index_cast %18 : i32 to index
      %c0_16 = arith.constant 0 : index
      %41 = vector.load %arg2[%c7, %40, %c0_16] : memref<9x8x128xf32, #tpu.memory_space<vmem>>, vector<1x8x128xf32>
      %42 = vector.shape_cast %41 : vector<1x8x128xf32> to vector<8x128xf32>
      %c8 = arith.constant 8 : index
      %43 = arith.index_cast %18 : i32 to index
      %c0_17 = arith.constant 0 : index
      %44 = vector.load %arg2[%c8, %43, %c0_17] : memref<9x8x128xf32, #tpu.memory_space<vmem>>, vector<1x8x128xf32>
      %45 = vector.shape_cast %44 : vector<1x8x128xf32> to vector<8x128xf32>
      %46 = arith.mulf %21, %21 : vector<8x128xf32>
      %47 = arith.mulf %24, %24 : vector<8x128xf32>
      %48 = arith.addf %46, %47 : vector<8x128xf32>
      %49 = arith.mulf %27, %27 : vector<8x128xf32>
      %50 = arith.addf %48, %49 : vector<8x128xf32>
      %51 = arith.mulf %30, %30 : vector<8x128xf32>
      %52 = arith.mulf %33, %33 : vector<8x128xf32>
      %53 = arith.addf %51, %52 : vector<8x128xf32>
      %54 = arith.mulf %36, %36 : vector<8x128xf32>
      %55 = arith.addf %53, %54 : vector<8x128xf32>
      %56 = arith.mulf %39, %39 : vector<8x128xf32>
      %57 = arith.mulf %42, %42 : vector<8x128xf32>
      %58 = arith.addf %56, %57 : vector<8x128xf32>
      %59 = arith.mulf %45, %45 : vector<8x128xf32>
      %60 = arith.addf %58, %59 : vector<8x128xf32>
      %61 = arith.mulf %21, %30 : vector<8x128xf32>
      %62 = arith.mulf %24, %33 : vector<8x128xf32>
      %63 = arith.addf %61, %62 : vector<8x128xf32>
      %64 = arith.mulf %27, %36 : vector<8x128xf32>
      %65 = arith.addf %63, %64 : vector<8x128xf32>
      %66 = arith.mulf %21, %39 : vector<8x128xf32>
      %67 = arith.mulf %24, %42 : vector<8x128xf32>
      %68 = arith.addf %66, %67 : vector<8x128xf32>
      %69 = arith.mulf %27, %45 : vector<8x128xf32>
      %70 = arith.addf %68, %69 : vector<8x128xf32>
      %71 = arith.mulf %30, %39 : vector<8x128xf32>
      %72 = arith.mulf %33, %42 : vector<8x128xf32>
      %73 = arith.addf %71, %72 : vector<8x128xf32>
      %74 = arith.mulf %36, %45 : vector<8x128xf32>
      %75 = arith.addf %73, %74 : vector<8x128xf32>
      %cst = arith.constant 9.99999997E-7 : f32
      %76 = vector.broadcast %cst : f32 to vector<8x128xf32>
      %77 = arith.addf %50, %76 : vector<8x128xf32>
      %78 = math.sqrt %77 : vector<8x128xf32>
      %cst_18 = arith.constant 9.99999997E-7 : f32
      %79 = vector.broadcast %cst_18 : f32 to vector<8x128xf32>
      %80 = arith.addf %55, %79 : vector<8x128xf32>
      %81 = math.sqrt %80 : vector<8x128xf32>
      %cst_19 = arith.constant 9.99999997E-7 : f32
      %82 = vector.broadcast %cst_19 : f32 to vector<8x128xf32>
      %83 = arith.addf %60, %82 : vector<8x128xf32>
      %84 = math.sqrt %83 : vector<8x128xf32>
      %85 = arith.mulf %78, %81 : vector<8x128xf32>
      %cst_20 = arith.constant 9.99999997E-7 : f32
      %86 = vector.broadcast %cst_20 : f32 to vector<8x128xf32>
      %87 = arith.addf %85, %86 : vector<8x128xf32>
      %88 = arith.divf %65, %87 : vector<8x128xf32>
      %89 = arith.mulf %78, %84 : vector<8x128xf32>
      %cst_21 = arith.constant 9.99999997E-7 : f32
      %90 = vector.broadcast %cst_21 : f32 to vector<8x128xf32>
      %91 = arith.addf %89, %90 : vector<8x128xf32>
      %92 = arith.divf %70, %91 : vector<8x128xf32>
      %93 = arith.mulf %88, %88 : vector<8x128xf32>
      %cst_22 = arith.constant 1.000000e+00 : f32
      %94 = vector.broadcast %cst_22 : f32 to vector<8x128xf32>
      %95 = arith.subf %94, %93 : vector<8x128xf32>
      %cst_23 = arith.constant 9.99999997E-7 : f32
      %96 = vector.broadcast %cst_23 : f32 to vector<8x128xf32>
      %97 = arith.addf %95, %96 : vector<8x128xf32>
      %98 = math.sqrt %97 : vector<8x128xf32>
      %99 = arith.mulf %92, %92 : vector<8x128xf32>
      %cst_24 = arith.constant 1.000000e+00 : f32
      %100 = vector.broadcast %cst_24 : f32 to vector<8x128xf32>
      %101 = arith.subf %100, %99 : vector<8x128xf32>
      %cst_25 = arith.constant 9.99999997E-7 : f32
      %102 = vector.broadcast %cst_25 : f32 to vector<8x128xf32>
      %103 = arith.addf %101, %102 : vector<8x128xf32>
      %104 = math.sqrt %103 : vector<8x128xf32>
      %cst_26 = arith.constant 9.99999997E-7 : f32
      %105 = vector.broadcast %cst_26 : f32 to vector<8x128xf32>
      %106 = arith.addf %50, %105 : vector<8x128xf32>
      %cst_27 = arith.constant 1.000000e+00 : f32
      %107 = vector.broadcast %cst_27 : f32 to vector<8x128xf32>
      %108 = arith.divf %107, %106 : vector<8x128xf32>
      %109 = arith.mulf %65, %108 : vector<8x128xf32>
      %110 = arith.mulf %70, %108 : vector<8x128xf32>
      %111 = arith.mulf %109, %70 : vector<8x128xf32>
      %112 = arith.subf %75, %111 : vector<8x128xf32>
      %113 = arith.mulf %110, %65 : vector<8x128xf32>
      %114 = arith.subf %112, %113 : vector<8x128xf32>
      %115 = arith.mulf %109, %110 : vector<8x128xf32>
      %116 = arith.mulf %115, %50 : vector<8x128xf32>
      %117 = arith.addf %114, %116 : vector<8x128xf32>
      %118 = arith.mulf %81, %98 : vector<8x128xf32>
      %119 = arith.mulf %84, %104 : vector<8x128xf32>
      %120 = arith.mulf %118, %119 : vector<8x128xf32>
      %cst_28 = arith.constant 9.99999997E-7 : f32
      %121 = vector.broadcast %cst_28 : f32 to vector<8x128xf32>
      %122 = arith.addf %120, %121 : vector<8x128xf32>
      %123 = arith.divf %117, %122 : vector<8x128xf32>
      %cst_29 = arith.constant 1.000000e+00 : f32
      %124 = vector.broadcast %cst_29 : f32 to vector<8x128xf32>
      %125 = arith.subf %124, %123 : vector<8x128xf32>
      %126 = arith.addf %16, %125 : vector<8x128xf32>
      %c0_30 = arith.constant 0 : index
      %c0_31 = arith.constant 0 : index
      %127 = vector.load %arg4[%c0_30, %c0_31] : memref<8x128xf32, #tpu.memory_space<vmem>>, vector<8x128xf32>
      tpu.vector_store %arg4[%c0_30, %c0_31], %126 {strides = array<i32>} : memref<8x128xf32, #tpu.memory_space<vmem>>, vector<8x128xf32>,
      %c1_i32_32 = arith.constant 1 : i32
    } else {
    }
    %true = arith.constant true
    %10 = arith.xori %7, %true : i1
    %11 = arith.extui %10 : i1 to i32
    %c0_i32_3 = arith.constant 0 : i32
    %12 = arith.cmpi ne, %11, %c0_i32_3 : i32
    scf.if %12 {
      %16 = tpu.iota {dimensions = array<i32: 0>} : vector<8x128xi32>
      %17 = tpu.iota {dimensions = array<i32: 1>} : vector<8x128xi32>
      %c128_i32 = arith.constant 128 : i32
      %18 = vector.broadcast %c128_i32 : i32 to vector<8x128xi32>
      %19 = arith.muli %16, %18 : vector<8x128xi32>
      %20 = vector.broadcast %5 : i32 to vector<8x128xi32>
      %21 = arith.addi %20, %19 : vector<8x128xi32>
      %22 = arith.addi %21, %17 : vector<8x128xi32>
      %c0_i32_6 = arith.constant 0 : i32
      %c8_i32 = arith.constant 8 : i32
      %23 = arith.muli %c0_i32_6, %c8_i32 : i32
      %24 = tpu.assume_multiple %23, 8 : i32
      %c0 = arith.constant 0 : index
      %25 = arith.index_cast %24 : i32 to index
      %c0_7 = arith.constant 0 : index
      %26 = vector.load %arg2[%c0, %25, %c0_7] : memref<9x8x128xf32, #tpu.memory_space<vmem>>, vector<1x8x128xf32>
      %27 = vector.shape_cast %26 : vector<1x8x128xf32> to vector<8x128xf32>
      %c1 = arith.constant 1 : index
      %28 = arith.index_cast %24 : i32 to index
      %c0_8 = arith.constant 0 : index
      %29 = vector.load %arg2[%c1, %28, %c0_8] : memref<9x8x128xf32, #tpu.memory_space<vmem>>, vector<1x8x128xf32>
      %30 = vector.shape_cast %29 : vector<1x8x128xf32> to vector<8x128xf32>
      %c2 = arith.constant 2 : index
      %31 = arith.index_cast %24 : i32 to index
      %c0_9 = arith.constant 0 : index
      %32 = vector.load %arg2[%c2, %31, %c0_9] : memref<9x8x128xf32, #tpu.memory_space<vmem>>, vector<1x8x128xf32>
      %33 = vector.shape_cast %32 : vector<1x8x128xf32> to vector<8x128xf32>
      %c3 = arith.constant 3 : index
      %34 = arith.index_cast %24 : i32 to index
      %c0_10 = arith.constant 0 : index
      %35 = vector.load %arg2[%c3, %34, %c0_10] : memref<9x8x128xf32, #tpu.memory_space<vmem>>, vector<1x8x128xf32>
      %36 = vector.shape_cast %35 : vector<1x8x128xf32> to vector<8x128xf32>
      %c4 = arith.constant 4 : index
      %37 = arith.index_cast %24 : i32 to index
      %c0_11 = arith.constant 0 : index
      %38 = vector.load %arg2[%c4, %37, %c0_11] : memref<9x8x128xf32, #tpu.memory_space<vmem>>, vector<1x8x128xf32>
      %39 = vector.shape_cast %38 : vector<1x8x128xf32> to vector<8x128xf32>
      %c5 = arith.constant 5 : index
      %40 = arith.index_cast %24 : i32 to index
      %c0_12 = arith.constant 0 : index
      %41 = vector.load %arg2[%c5, %40, %c0_12] : memref<9x8x128xf32, #tpu.memory_space<vmem>>, vector<1x8x128xf32>
      %42 = vector.shape_cast %41 : vector<1x8x128xf32> to vector<8x128xf32>
      %c6 = arith.constant 6 : index
      %43 = arith.index_cast %24 : i32 to index
      %c0_13 = arith.constant 0 : index
      %44 = vector.load %arg2[%c6, %43, %c0_13] : memref<9x8x128xf32, #tpu.memory_space<vmem>>, vector<1x8x128xf32>
      %45 = vector.shape_cast %44 : vector<1x8x128xf32> to vector<8x128xf32>
      %c7 = arith.constant 7 : index
      %46 = arith.index_cast %24 : i32 to index
      %c0_14 = arith.constant 0 : index
      %47 = vector.load %arg2[%c7, %46, %c0_14] : memref<9x8x128xf32, #tpu.memory_space<vmem>>, vector<1x8x128xf32>
      %48 = vector.shape_cast %47 : vector<1x8x128xf32> to vector<8x128xf32>
      %c8 = arith.constant 8 : index
      %49 = arith.index_cast %24 : i32 to index
      %c0_15 = arith.constant 0 : index
      %50 = vector.load %arg2[%c8, %49, %c0_15] : memref<9x8x128xf32, #tpu.memory_space<vmem>>, vector<1x8x128xf32>
      %51 = vector.shape_cast %50 : vector<1x8x128xf32> to vector<8x128xf32>
      %52 = arith.mulf %27, %27 : vector<8x128xf32>
      %53 = arith.mulf %30, %30 : vector<8x128xf32>
      %54 = arith.addf %52, %53 : vector<8x128xf32>
      %55 = arith.mulf %33, %33 : vector<8x128xf32>
      %56 = arith.addf %54, %55 : vector<8x128xf32>
      %57 = arith.mulf %36, %36 : vector<8x128xf32>
      %58 = arith.mulf %39, %39 : vector<8x128xf32>
      %59 = arith.addf %57, %58 : vector<8x128xf32>
      %60 = arith.mulf %42, %42 : vector<8x128xf32>
      %61 = arith.addf %59, %60 : vector<8x128xf32>
      %62 = arith.mulf %45, %45 : vector<8x128xf32>
      %63 = arith.mulf %48, %48 : vector<8x128xf32>
      %64 = arith.addf %62, %63 : vector<8x128xf32>
      %65 = arith.mulf %51, %51 : vector<8x128xf32>
      %66 = arith.addf %64, %65 : vector<8x128xf32>
      %67 = arith.mulf %27, %36 : vector<8x128xf32>
      %68 = arith.mulf %30, %39 : vector<8x128xf32>
      %69 = arith.addf %67, %68 : vector<8x128xf32>
      %70 = arith.mulf %33, %42 : vector<8x128xf32>
      %71 = arith.addf %69, %70 : vector<8x128xf32>
      %72 = arith.mulf %27, %45 : vector<8x128xf32>
      %73 = arith.mulf %30, %48 : vector<8x128xf32>
      %74 = arith.addf %72, %73 : vector<8x128xf32>
      %75 = arith.mulf %33, %51 : vector<8x128xf32>
      %76 = arith.addf %74, %75 : vector<8x128xf32>
      %77 = arith.mulf %36, %45 : vector<8x128xf32>
      %78 = arith.mulf %39, %48 : vector<8x128xf32>
      %79 = arith.addf %77, %78 : vector<8x128xf32>
      %80 = arith.mulf %42, %51 : vector<8x128xf32>
      %81 = arith.addf %79, %80 : vector<8x128xf32>
      %cst = arith.constant 9.99999997E-7 : f32
      %82 = vector.broadcast %cst : f32 to vector<8x128xf32>
      %83 = arith.addf %56, %82 : vector<8x128xf32>
      %84 = math.sqrt %83 : vector<8x128xf32>
      %cst_16 = arith.constant 9.99999997E-7 : f32
      %85 = vector.broadcast %cst_16 : f32 to vector<8x128xf32>
      %86 = arith.addf %61, %85 : vector<8x128xf32>
      %87 = math.sqrt %86 : vector<8x128xf32>
      %cst_17 = arith.constant 9.99999997E-7 : f32
      %88 = vector.broadcast %cst_17 : f32 to vector<8x128xf32>
      %89 = arith.addf %66, %88 : vector<8x128xf32>
      %90 = math.sqrt %89 : vector<8x128xf32>
      %91 = arith.mulf %84, %87 : vector<8x128xf32>
      %cst_18 = arith.constant 9.99999997E-7 : f32
      %92 = vector.broadcast %cst_18 : f32 to vector<8x128xf32>
      %93 = arith.addf %91, %92 : vector<8x128xf32>
      %94 = arith.divf %71, %93 : vector<8x128xf32>
      %95 = arith.mulf %84, %90 : vector<8x128xf32>
      %cst_19 = arith.constant 9.99999997E-7 : f32
      %96 = vector.broadcast %cst_19 : f32 to vector<8x128xf32>
      %97 = arith.addf %95, %96 : vector<8x128xf32>
      %98 = arith.divf %76, %97 : vector<8x128xf32>
      %99 = arith.mulf %94, %94 : vector<8x128xf32>
      %cst_20 = arith.constant 1.000000e+00 : f32
      %100 = vector.broadcast %cst_20 : f32 to vector<8x128xf32>
      %101 = arith.subf %100, %99 : vector<8x128xf32>
      %cst_21 = arith.constant 9.99999997E-7 : f32
      %102 = vector.broadcast %cst_21 : f32 to vector<8x128xf32>
      %103 = arith.addf %101, %102 : vector<8x128xf32>
      %104 = math.sqrt %103 : vector<8x128xf32>
      %105 = arith.mulf %98, %98 : vector<8x128xf32>
      %cst_22 = arith.constant 1.000000e+00 : f32
      %106 = vector.broadcast %cst_22 : f32 to vector<8x128xf32>
      %107 = arith.subf %106, %105 : vector<8x128xf32>
      %cst_23 = arith.constant 9.99999997E-7 : f32
      %108 = vector.broadcast %cst_23 : f32 to vector<8x128xf32>
      %109 = arith.addf %107, %108 : vector<8x128xf32>
      %110 = math.sqrt %109 : vector<8x128xf32>
      %cst_24 = arith.constant 9.99999997E-7 : f32
      %111 = vector.broadcast %cst_24 : f32 to vector<8x128xf32>
      %112 = arith.addf %56, %111 : vector<8x128xf32>
      %cst_25 = arith.constant 1.000000e+00 : f32
      %113 = vector.broadcast %cst_25 : f32 to vector<8x128xf32>
      %114 = arith.divf %113, %112 : vector<8x128xf32>
      %115 = arith.mulf %71, %114 : vector<8x128xf32>
      %116 = arith.mulf %76, %114 : vector<8x128xf32>
      %117 = arith.mulf %115, %76 : vector<8x128xf32>
      %118 = arith.subf %81, %117 : vector<8x128xf32>
      %119 = arith.mulf %116, %71 : vector<8x128xf32>
      %120 = arith.subf %118, %119 : vector<8x128xf32>
      %121 = arith.mulf %115, %116 : vector<8x128xf32>
      %122 = arith.mulf %121, %56 : vector<8x128xf32>
      %123 = arith.addf %120, %122 : vector<8x128xf32>
      %124 = arith.mulf %87, %104 : vector<8x128xf32>
      %125 = arith.mulf %90, %110 : vector<8x128xf32>
      %126 = arith.mulf %124, %125 : vector<8x128xf32>
      %cst_26 = arith.constant 9.99999997E-7 : f32
      %127 = vector.broadcast %cst_26 : f32 to vector<8x128xf32>
      %128 = arith.addf %126, %127 : vector<8x128xf32>
      %129 = arith.divf %123, %128 : vector<8x128xf32>
      %cst_27 = arith.constant 1.000000e+00 : f32
      %130 = vector.broadcast %cst_27 : f32 to vector<8x128xf32>
      %131 = arith.subf %130, %129 : vector<8x128xf32>
      %c1024_i32_28 = arith.constant 1024 : i32
      %132 = arith.muli %c0_i32_6, %c1024_i32_28 : i32
      %133 = vector.broadcast %132 : i32 to vector<8x128xi32>
      %134 = arith.addi %22, %133 : vector<8x128xi32>
      %c0_29 = arith.constant 0 : index
      %c0_30 = arith.constant 0 : index
      %135 = vector.load %arg4[%c0_29, %c0_30] : memref<8x128xf32, #tpu.memory_space<vmem>>, vector<8x128xf32>
      %c12_i32_31 = arith.constant 12 : i32
      %136 = vector.broadcast %c12_i32_31 : i32 to vector<8x128xi32>
      %137 = arith.cmpi slt, %134, %136 : vector<8x128xi32>
      %cst_32 = arith.constant 0.000000e+00 : f32
      %138 = vector.broadcast %cst_32 : f32 to vector<8x128xf32>
      %139 = arith.select %137, %131, %138 : vector<8x128xi1>, vector<8x128xf32>
      %140 = arith.addf %135, %139 : vector<8x128xf32>
      %c0_33 = arith.constant 0 : index
      %c0_34 = arith.constant 0 : index
      %141 = vector.load %arg4[%c0_33, %c0_34] : memref<8x128xf32, #tpu.memory_space<vmem>>, vector<8x128xf32>
      tpu.vector_store %arg4[%c0_33, %c0_34], %140 {strides = array<i32>} : memref<8x128xf32, #tpu.memory_space<vmem>>, vector<8x128xf32>,
      %c1_i32_35 = arith.constant 1 : i32
    } else {
    }
    %c0_i32_4 = arith.constant 0 : i32
    %13 = arith.cmpi eq, %arg1, %c0_i32_4 : i32
    %14 = arith.extui %13 : i1 to i32
    %c0_i32_5 = arith.constant 0 : i32
    %15 = arith.cmpi ne, %14, %c0_i32_5 : i32
    scf.if %15 {
      %c0 = arith.constant 0 : index
      %c0_6 = arith.constant 0 : index
      %16 = vector.load %arg4[%c0, %c0_6] : memref<8x128xf32, #tpu.memory_space<vmem>>, vector<8x128xf32>
      %17 = vector.shape_cast %16 : vector<8x128xf32> to vector<1x8x128xf32>
      %cst = arith.constant dense<0.000000e+00> : vector<1xf32>
      %18 = vector.multi_reduction <add>, %17, %cst [1, 2] : vector<1x8x128xf32> to vector<1xf32>
      %19 = vector.shape_cast %18 : vector<1xf32> to vector<1x1x1xf32>
      %20 = vector.extract %19[0, 0, 0] : f32 from vector<1x1x1xf32>
      %c0_7 = arith.constant 0 : index
      %c0_8 = arith.constant 0 : index
      %21 = memref.load %arg3[%c0_7, %c0_8] : memref<1x1xf32, #tpu.memory_space<smem>>
      memref.store %20, %arg3[%c0_7, %c0_8] : memref<1x1xf32, #tpu.memory_space<smem>>
    } else {
    }
    return
  }
  func.func @transform_0(%arg0: i32, %arg1: i32) -> (i32, i32, i32) {
    %c1_i32 = arith.constant 1 : i32
    %0 = arith.muli %arg0, %c1_i32 : i32
    %1 = arith.addi %0, %arg1 : i32
    %c0_i32 = arith.constant 0 : i32
    %c0_i32_0 = arith.constant 0 : i32
    %c0_i32_1 = arith.constant 0 : i32
    return %c0_i32, %1, %c0_i32_0 : i32, i32, i32
  }
  func.func @transform_1(%arg0: i32, %arg1: i32) -> (i32, i32) {
    %c0_i32 = arith.constant 0 : i32
    %c0_i32_0 = arith.constant 0 : i32
    return %arg0, %c0_i32 : i32, i32
  }
}

</mosaic_0001>

<llo_original>
// kernel: flatten_loss_original.1
$region0: #{flatten_loss_original.1}
  #allocation0 [shape = 'u32[]', space=smem, size = 0x4, offset = 0x4, fixed_abs, tag = 'smem constant byte address 0x4 - core index']
  #allocation1 [shape = 'u32[144,128]{1,0:T(1,128)}', space=vmem, size = 0x12000, scoped, tag = 'internal scratch']
  #allocation2 [shape = 'f32[8,128]{1,0:T(8,128)}', space=vmem, size = 0x1000, scoped, tag = 'scratch operand']
  %s0 = inlined_call_operand.vmem [shape: f32[9,8,128], index: 0, kind: input, shape index: {}]
  %s1 = inlined_call_operand.hbm [shape: f32[1,1], index: 1, kind: output, shape index: {}]
  %s2 = sld [smem:[#allocation0]]
  $region30: #{flatten_loss_original.1} parent=0
    _
  %s4 = ssub.s32 1, %s2
  %s5 = scalar_select 0, %s4, %s2
  $region1: #{flatten_loss_original.1} parent=0
    #allocation3 [shape = 'u8[512]{0}', space=smem, size = 0x200, scoped, tag = 'output window, operand 0, single buffered']
    #allocation4 [shape = 's32[1]{0}', space=sflag, size = 0x4, scoped, tag = 'scoped memory for flatten_loss_original.1']
    %6 = vsyncpa [#allocation4], 0
    // Predicated region
    $region2: #{flatten_loss_original.1} parent=1 // pred_check
      _
    $region3: #{flatten_loss_original.1} parent=1 // pred_check_branch
      %8 = sbr.rel (0) target = $region5
    $region4: #{flatten_loss_original.1} parent=1 // pred_region
      %s9 = sadd.s32 0, 0
      %p10 = scmp.lt.s32.totalorder %s9, 0
      %s11 = scalar_select %p10, %s9, 0
      %s12 = smul.addr %s11, 8
      %s13 = scalar_lea.vmem %s0, %s12
      %s14 = sadd.s32 0, 0
    $region5: #{flatten_loss_original.1} parent=1 // pred_fallthru
      _
    %s15 = sadd.s32 0, 0
    %p16 = scmp.lt.s32.totalorder %s15, 0
    %s17 = scalar_select %p16, %s15, 0
    %s18 = smul.addr %s17, 8
    %s19 = scalar_lea.vmem %s0, %s18
    %s20 = sadd.s32 0, 0
    %p21 = scmp.lt.s32.totalorder %s20, 0
    %s22 = scalar_select %p21, %s20, 0
    %s23 = smul.addr %s22, 8
    %s24 = scalar_lea.vmem %s0, %s23
    %s25 = sadd.s32 0, 0
    %p26 = scmp.eq.s32.totalorder 0, 0
    // Predicated region
    $region6: #{flatten_loss_original.1} parent=1 // pred_check
      %p27 = pneg %p26
    $region7: #{flatten_loss_original.1} parent=1 // pred_check_branch
      %29 = sbr.rel (%p27) target = $region9
    $region8: #{flatten_loss_original.1} parent=1 // pred_region
      %30 = vst [vmem:[#allocation2] sm:$0xff] 0.0
    $region9: #{flatten_loss_original.1} parent=1 // pred_fallthru
      _
    %s31 = sadd.s32 0, 0
    %s32 = smul.u32 %s31, 1024
    %s33 = sadd.s32 %s32, 1024
    %p34 = scmp.le.s32.totalorder %s33, 12
    // Predicated region
    $region10: #{flatten_loss_original.1} parent=1 // pred_check
      %p35 = pneg %p34
    $region11: #{flatten_loss_original.1} parent=1 // pred_check_branch
      %37 = sbr.rel (%p35) target = $region13
    $region12: #{flatten_loss_original.1} parent=1 // pred_region
      %v38 = vld [vmem:[#allocation2] sm:$0xff]
      %v39 = vld [vmem:[%s24] sm:$0xff]
      %s40 = sadd.s32 0, 8
      %s41 = scalar_lea.vmem %s24, %s40
      %v42 = vld [vmem:[%s41] sm:$0xff]
      %s43 = sadd.s32 0, 16
      %s44 = scalar_lea.vmem %s24, %s43
      %v45 = vld [vmem:[%s44] sm:$0xff]
      %s46 = sadd.s32 0, 24
      %s47 = scalar_lea.vmem %s24, %s46
      %v48 = vld [vmem:[%s47] sm:$0xff]
      %s49 = sadd.s32 0, 32
      %s50 = scalar_lea.vmem %s24, %s49
      %v51 = vld [vmem:[%s50] sm:$0xff]
      %s52 = sadd.s32 0, 40
      %s53 = scalar_lea.vmem %s24, %s52
      %v54 = vld [vmem:[%s53] sm:$0xff]
      %s55 = sadd.s32 0, 48
      %s56 = scalar_lea.vmem %s24, %s55
      %v57 = vld [vmem:[%s56] sm:$0xff]
      %s58 = sadd.s32 0, 56
      %s59 = scalar_lea.vmem %s24, %s58
      %v60 = vld [vmem:[%s59] sm:$0xff]
      %s61 = sadd.s32 0, 64
      %s62 = scalar_lea.vmem %s24, %s61
      %v63 = vld [vmem:[%s62] sm:$0xff]
      %v64 = vmul.f32 %v39, %v39
      %v65 = vmul.f32 %v42, %v42
      %v66 = vadd.f32 %v64, %v65
      %v67 = vmul.f32 %v45, %v45
      %v68 = vadd.f32 %v66, %v67
      %v69 = vmul.f32 %v48, %v48
      %v70 = vmul.f32 %v51, %v51
      %v71 = vadd.f32 %v69, %v70
      %v72 = vmul.f32 %v54, %v54
      %v73 = vadd.f32 %v71, %v72
      %v74 = vmul.f32 %v57, %v57
      %v75 = vmul.f32 %v60, %v60
      %v76 = vadd.f32 %v74, %v75
      %v77 = vmul.f32 %v63, %v63
      %v78 = vadd.f32 %v76, %v77
      %v79 = vmul.f32 %v39, %v48
      %v80 = vmul.f32 %v42, %v51
      %v81 = vadd.f32 %v79, %v80
      %v82 = vmul.f32 %v45, %v54
      %v83 = vadd.f32 %v81, %v82
      %v84 = vmul.f32 %v39, %v57
      %v85 = vmul.f32 %v42, %v60
      %v86 = vadd.f32 %v84, %v85
      %v87 = vmul.f32 %v45, %v63
      %v88 = vadd.f32 %v86, %v87
      %v89 = vmul.f32 %v48, %v57
      %v90 = vmul.f32 %v51, %v60
      %v91 = vadd.f32 %v89, %v90
      %v92 = vmul.f32 %v54, %v63
      %v93 = vadd.f32 %v91, %v92
      %v94 = vadd.f32 %v68, 1e-06
      %v95 = vrsqrt.pop %v94
      %v96 = vmul.f32 %v94, %v95
      %vm97 = vcmp.eq.f32.partialorder %v94, inf
      %v98 = vsel %vm97, %v94, %v96
      %vm99 = vcmp.eq.f32.partialorder %v94, 0.0
      %v100 = vand.u32 %v94, 2147483648
      %v101 = vsel %vm99, %v100, %v98
      %v102 = vadd.f32 %v73, 1e-06
      %v103 = vrsqrt.pop %v102
      %v104 = vmul.f32 %v102, %v103
      %vm105 = vcmp.eq.f32.partialorder %v102, inf
      %v106 = vsel %vm105, %v102, %v104
      %vm107 = vcmp.eq.f32.partialorder %v102, 0.0
      %v108 = vand.u32 %v102, 2147483648
      %v109 = vsel %vm107, %v108, %v106
      %v110 = vadd.f32 %v78, 1e-06
      %v111 = vrsqrt.pop %v110
      %v112 = vmul.f32 %v110, %v111
      %vm113 = vcmp.eq.f32.partialorder %v110, inf
      %v114 = vsel %vm113, %v110, %v112
      %vm115 = vcmp.eq.f32.partialorder %v110, 0.0
      %v116 = vand.u32 %v110, 2147483648
      %v117 = vsel %vm115, %v116, %v114
      %v118 = vmul.f32 %v101, %v109
      %v119 = vadd.f32 %v118, 1e-06
      %v120 = vrcp.pop %v119
      %v121 = vmul.f32 %v83, %v120
      %v122 = vmul.f32 %v101, %v117
      %v123 = vadd.f32 %v122, 1e-06
      %v124 = vrcp.pop %v123
      %v125 = vmul.f32 %v88, %v124
      %v126 = vmul.f32 %v121, %v121
      %v127 = vsub.f32 1.0, %v126
      %v128 = vadd.f32 %v127, 1e-06
      %v129 = vrsqrt.pop %v128
      %v130 = vmul.f32 %v128, %v129
      %vm131 = vcmp.eq.f32.partialorder %v128, inf
      %v132 = vsel %vm131, %v128, %v130
      %vm133 = vcmp.eq.f32.partialorder %v128, 0.0
      %v134 = vand.u32 %v128, 2147483648
      %v135 = vsel %vm133, %v134, %v132
      %v136 = vmul.f32 %v125, %v125
      %v137 = vsub.f32 1.0, %v136
      %v138 = vadd.f32 %v137, 1e-06
      %v139 = vrsqrt.pop %v138
      %v140 = vmul.f32 %v138, %v139
      %vm141 = vcmp.eq.f32.partialorder %v138, inf
      %v142 = vsel %vm141, %v138, %v140
      %vm143 = vcmp.eq.f32.partialorder %v138, 0.0
      %v144 = vand.u32 %v138, 2147483648
      %v145 = vsel %vm143, %v144, %v142
      %v146 = vrcp.pop %v94
      %v147 = vmul.f32 1.0, %v146
      %v148 = vmul.f32 %v83, %v147
      %v149 = vmul.f32 %v88, %v147
      %v150 = vmul.f32 %v148, %v88
      %v151 = vsub.f32 %v93, %v150
      %v152 = vmul.f32 %v149, %v83
      %v153 = vsub.f32 %v151, %v152
      %v154 = vmul.f32 %v148, %v149
      %v155 = vmul.f32 %v154, %v68
      %v156 = vadd.f32 %v153, %v155
      %v157 = vmul.f32 %v109, %v135
      %v158 = vmul.f32 %v117, %v145
      %v159 = vmul.f32 %v157, %v158
      %v160 = vadd.f32 %v159, 1e-06
      %v161 = vrcp.pop %v160
      %v162 = vmul.f32 %v156, %v161
      %v163 = vsub.f32 1.0, %v162
      %v164 = vadd.f32 %v38, %v163
      %165 = vst [vmem:[#allocation2] sm:$0xff] %v164
    $region13: #{flatten_loss_original.1} parent=1 // pred_fallthru
      _
    %p166 = scmp.gt.s32.totalorder %s33, 12
    // Predicated region
    $region14: #{flatten_loss_original.1} parent=1 // pred_check
      %p167 = pneg %p166
    $region15: #{flatten_loss_original.1} parent=1 // pred_check_branch
      %169 = sbr.rel (%p167) target = $region17
    $region16: #{flatten_loss_original.1} parent=1 // pred_region
      %v170 = vlaneseq
      %v171 = vshrl.u32 %v170, 7
      %v172 = vlaneseq
      %v173 = vand.u32 %v172, 127
      %v174 = vmul.u32 %v171, 128
      %v175 = vstv %s32
      %v176 = vadd.s32 %v175, %v174
      %v177 = vadd.s32 %v176, %v173
      %v178 = vld [vmem:[%s24] sm:$0xff]
      %s179 = sadd.s32 0, 8
      %s180 = scalar_lea.vmem %s24, %s179
      %v181 = vld [vmem:[%s180] sm:$0xff]
      %s182 = sadd.s32 0, 16
      %s183 = scalar_lea.vmem %s24, %s182
      %v184 = vld [vmem:[%s183] sm:$0xff]
      %s185 = sadd.s32 0, 24
      %s186 = scalar_lea.vmem %s24, %s185
      %v187 = vld [vmem:[%s186] sm:$0xff]
      %s188 = sadd.s32 0, 32
      %s189 = scalar_lea.vmem %s24, %s188
      %v190 = vld [vmem:[%s189] sm:$0xff]
      %s191 = sadd.s32 0, 40
      %s192 = scalar_lea.vmem %s24, %s191
      %v193 = vld [vmem:[%s192] sm:$0xff]
      %s194 = sadd.s32 0, 48
      %s195 = scalar_lea.vmem %s24, %s194
      %v196 = vld [vmem:[%s195] sm:$0xff]
      %s197 = sadd.s32 0, 56
      %s198 = scalar_lea.vmem %s24, %s197
      %v199 = vld [vmem:[%s198] sm:$0xff]
      %s200 = sadd.s32 0, 64
      %s201 = scalar_lea.vmem %s24, %s200
      %v202 = vld [vmem:[%s201] sm:$0xff]
      %v203 = vmul.f32 %v178, %v178
      %v204 = vmul.f32 %v181, %v181
      %v205 = vadd.f32 %v203, %v204
      %v206 = vmul.f32 %v184, %v184
      %v207 = vadd.f32 %v205, %v206
      %v208 = vmul.f32 %v187, %v187
      %v209 = vmul.f32 %v190, %v190
      %v210 = vadd.f32 %v208, %v209
      %v211 = vmul.f32 %v193, %v193
      %v212 = vadd.f32 %v210, %v211
      %v213 = vmul.f32 %v196, %v196
      %v214 = vmul.f32 %v199, %v199
      %v215 = vadd.f32 %v213, %v214
      %v216 = vmul.f32 %v202, %v202
      %v217 = vadd.f32 %v215, %v216
      %v218 = vmul.f32 %v178, %v187
      %v219 = vmul.f32 %v181, %v190
      %v220 = vadd.f32 %v218, %v219
      %v221 = vmul.f32 %v184, %v193
      %v222 = vadd.f32 %v220, %v221
      %v223 = vmul.f32 %v178, %v196
      %v224 = vmul.f32 %v181, %v199
      %v225 = vadd.f32 %v223, %v224
      %v226 = vmul.f32 %v184, %v202
      %v227 = vadd.f32 %v225, %v226
      %v228 = vmul.f32 %v187, %v196
      %v229 = vmul.f32 %v190, %v199
      %v230 = vadd.f32 %v228, %v229
      %v231 = vmul.f32 %v193, %v202
      %v232 = vadd.f32 %v230, %v231
      %v233 = vadd.f32 %v207, 1e-06
      %v234 = vrsqrt.pop %v233
      %v235 = vmul.f32 %v233, %v234
      %vm236 = vcmp.eq.f32.partialorder %v233, inf
      %v237 = vsel %vm236, %v233, %v235
      %vm238 = vcmp.eq.f32.partialorder %v233, 0.0
      %v239 = vand.u32 %v233, 2147483648
      %v240 = vsel %vm238, %v239, %v237
      %v241 = vadd.f32 %v212, 1e-06
      %v242 = vrsqrt.pop %v241
      %v243 = vmul.f32 %v241, %v242
      %vm244 = vcmp.eq.f32.partialorder %v241, inf
      %v245 = vsel %vm244, %v241, %v243
      %vm246 = vcmp.eq.f32.partialorder %v241, 0.0
      %v247 = vand.u32 %v241, 2147483648
      %v248 = vsel %vm246, %v247, %v245
      %v249 = vadd.f32 %v217, 1e-06
      %v250 = vrsqrt.pop %v249
      %v251 = vmul.f32 %v249, %v250
      %vm252 = vcmp.eq.f32.partialorder %v249, inf
      %v253 = vsel %vm252, %v249, %v251
      %vm254 = vcmp.eq.f32.partialorder %v249, 0.0
      %v255 = vand.u32 %v249, 2147483648
      %v256 = vsel %vm254, %v255, %v253
      %v257 = vmul.f32 %v240, %v248
      %v258 = vadd.f32 %v257, 1e-06
      %v259 = vrcp.pop %v258
      %v260 = vmul.f32 %v222, %v259
      %v261 = vmul.f32 %v240, %v256
      %v262 = vadd.f32 %v261, 1e-06
      %v263 = vrcp.pop %v262
      %v264 = vmul.f32 %v227, %v263
      %v265 = vmul.f32 %v260, %v260
      %v266 = vsub.f32 1.0, %v265
      %v267 = vadd.f32 %v266, 1e-06
      %v268 = vrsqrt.pop %v267
      %v269 = vmul.f32 %v267, %v268
      %vm270 = vcmp.eq.f32.partialorder %v267, inf
      %v271 = vsel %vm270, %v267, %v269
      %vm272 = vcmp.eq.f32.partialorder %v267, 0.0
      %v273 = vand.u32 %v267, 2147483648
      %v274 = vsel %vm272, %v273, %v271
      %v275 = vmul.f32 %v264, %v264
      %v276 = vsub.f32 1.0, %v275
      %v277 = vadd.f32 %v276, 1e-06
      %v278 = vrsqrt.pop %v277
      %v279 = vmul.f32 %v277, %v278
      %vm280 = vcmp.eq.f32.partialorder %v277, inf
      %v281 = vsel %vm280, %v277, %v279
      %vm282 = vcmp.eq.f32.partialorder %v277, 0.0
      %v283 = vand.u32 %v277, 2147483648
      %v284 = vsel %vm282, %v283, %v281
      %v285 = vrcp.pop %v233
      %v286 = vmul.f32 1.0, %v285
      %v287 = vmul.f32 %v222, %v286
      %v288 = vmul.f32 %v227, %v286
      %v289 = vmul.f32 %v287, %v227
      %v290 = vsub.f32 %v232, %v289
      %v291 = vmul.f32 %v288, %v222
      %v292 = vsub.f32 %v290, %v291
      %v293 = vmul.f32 %v287, %v288
      %v294 = vmul.f32 %v293, %v207
      %v295 = vadd.f32 %v292, %v294
      %v296 = vmul.f32 %v248, %v274
      %v297 = vmul.f32 %v256, %v284
      %v298 = vmul.f32 %v296, %v297
      %v299 = vadd.f32 %v298, 1e-06
      %v300 = vrcp.pop %v299
      %v301 = vmul.f32 %v295, %v300
      %v302 = vsub.f32 1.0, %v301
      %v303 = vld [vmem:[#allocation2] sm:$0xff]
      %vm304 = vcmp.lt.s32.totalorder %v177, 12
      %v305 = vsel %vm304, %v302, 0.0
      %v306 = vadd.f32 %v303, %v305
      %307 = vst [vmem:[#allocation2] sm:$0xff] %v306
    $region17: #{flatten_loss_original.1} parent=1 // pred_fallthru
      _
    // Predicated region
    $region18: #{flatten_loss_original.1} parent=1 // pred_check
      %p308 = pneg %p26
    $region19: #{flatten_loss_original.1} parent=1 // pred_check_branch
      %310 = sbr.rel (%p308) target = $region21
    $region20: #{flatten_loss_original.1} parent=1 // pred_region
      %v311 = vld [vmem:[#allocation2] sm:$0xff]
      %312 = vadd.xlane.f32.xlu0 %v311
      %v313 = vpop.xlane.xlu0 %312
      %v314 = vrot.slane %v313, 4
      %v315 = vadd.f32 %v313, %v314
      %v316 = vrot.slane %v315, 2
      %v317 = vadd.f32 %v315, %v316
      %v318 = vrot.slane %v317, 1
      %v319 = vadd.f32 %v317, %v318
      %s320 = vtos %v319
      %s321 = scalar_lea.smem [#allocation3], 0
      %322 = sst [smem:[%s321]] %s320
    $region21: #{flatten_loss_original.1} parent=1 // pred_fallthru
      _
    // Predicated region
    $region22: #{flatten_loss_original.1} parent=1 // pred_check
      _
    $region23: #{flatten_loss_original.1} parent=1 // pred_check_branch
      %324 = sbr.rel (0) target = $region25
    $region24: #{flatten_loss_original.1} parent=1 // pred_region
      %s326 = ssub.s32 16, 16
      %327 = vsyncadd [#allocation4], %s326
      %330 = dma.smem_to_hbm [#allocation3], 16, %s1, [#allocation4]
    $region25: #{flatten_loss_original.1} parent=1 // pred_fallthru
      _
    // Predicated region
    $region26: #{flatten_loss_original.1} parent=1 // pred_check
      _
    $region27: #{flatten_loss_original.1} parent=1 // pred_check_branch
      %332 = sbr.rel (0) target = $region29
    $region28: #{flatten_loss_original.1} parent=1 // pred_region
      %333 = dma.done [#allocation4], 16
    $region29: #{flatten_loss_original.1} parent=1 // pred_fallthru
      _
    %334 = sfence
    %335 = vsyncpa [#allocation4], 1

</llo_original>
